<compile_context>
chip_gen: v6e
topology: v6e:2x2x1
jax: 0.10.0
libtpu: 0.0.40
codegen_flags: <defaults>
</compile_context>

<pallas_src>
import functools
import math

import jax
import jax.numpy as jnp
import numpy as np
from jax.experimental import pallas as pl
from jax.experimental.pallas import tpu as pltpu

_LANES = 128
_SUB = 16          # sublane granularity safe for f32 and bf16 blocks
_TR_MAX = 1024     # 1024*128*4 B = 512 KiB per f32 plane per pipeline buffer

_LOG_EPS = math.log(1e-6)
_LOG_1M_EPS = math.log(1.0 - 1e-6)


def _wbce_kernel(*refs, w0, w1, gamma, lambda_sparse, n_total, single_logit):
    """One (TR, 128) lane-dense tile: elementwise loss terms + vreg-shaped
    partial-sum accumulation; scalar finalize on the last grid step."""
    it = iter(refs)
    l0_ref = None if single_logit else next(it)
    l1_ref = next(it)
    t_ref = next(it)
    out_ref = next(it)
    acc_main = next(it)
    acc_den = next(it) if gamma == 0.0 else None
    acc_sp = next(it) if lambda_sparse > 0.0 else None

    i = pl.program_id(0)

    @pl.when(i == 0)
    def _init():
        acc_main[...] = jnp.zeros_like(acc_main)
        if acc_den is not None:
            acc_den[...] = jnp.zeros_like(acc_den)
        if acc_sp is not None:
            acc_sp[...] = jnp.zeros_like(acc_sp)

    l1 = l1_ref[...].astype(jnp.float32)                      # (TR, 128)
    if single_logit:
        d = 2.0 * l1                                          # l1 - l0, with l0 = -l1
    else:
        d = l1 - l0_ref[...].astype(jnp.float32)

    t = t_ref[...].astype(jnp.float32)                        # 0 pad, 1 cls0, 2 cls1
    y = jnp.maximum(t - 1.0, 0.0)                             # {0., 1.}
    valid = jnp.minimum(t, 1.0)                               # {0., 1.}
    w = valid * (jnp.float32(w0) + jnp.float32(w1 - w0) * y)  # weights[labels], 0 on pads

    # log p(label) = -softplus(s*d),  s = +1 for y=0, -1 for y=1
    z = (1.0 - 2.0 * y) * d
    logp_y = -(jnp.maximum(z, 0.0) + jnp.log(1.0 + jnp.exp(-jnp.abs(z))))

    def _acc(ref, vals):
        # (TR,128) -> (TR//8, 8, 128); leading-axis sum = pure VPU vreg adds.
        ref[...] += vals.reshape(-1, 8, _LANES).sum(axis=0)

    if gamma == 0.0:
        # nn.CrossEntropyLoss(weight): sum(w_y * nll) / sum(w_y)
        _acc(acc_main, -w * logp_y)
        _acc(acc_den, w)
    else:
        # focal loss: mean over examples of -w_y * (1 - pt)^gamma * log(pt)
        # clip(exp(x), eps, 1-eps) == exp(clip(x, log eps, log(1-eps))), so the
        # clipped log(pt) is just the clipped logp_y (saves a second EUP log).
        log_pt = jnp.clip(logp_y, jnp.float32(_LOG_EPS), jnp.float32(_LOG_1M_EPS))
        pt = jnp.exp(log_pt)
        one_m_pt = 1.0 - pt
        g = float(gamma)
        if g == round(g) and 1.0 <= g <= 4.0:
            fw = one_m_pt
            for _ in range(int(g) - 1):
                fw = fw * one_m_pt
        else:
            fw = jnp.exp(jnp.float32(g) * jnp.log(one_m_pt))
        _acc(acc_main, -w * fw * log_pt)

    if lambda_sparse > 0.0:
        _acc(acc_sp, jnp.abs(l1) * valid)

    @pl.when(i == pl.num_programs(0) - 1)
    def _finalize():
        main_sum = jnp.sum(acc_main[...], keepdims=True)      # (1, 1)
        if gamma == 0.0:
            loss = main_sum / jnp.sum(acc_den[...], keepdims=True)
        else:
            loss = main_sum / jnp.float32(n_total)
        if lambda_sparse > 0.0:
            loss = loss + (jnp.float32(lambda_sparse)
                           * jnp.sum(acc_sp[...], keepdims=True)
                           / jnp.float32(n_total))
        out_ref[...] = loss


def weighted_bce_loss(preds, labels, *, weights=(1.0, 1.0),
                      gamma=0.0, lambda_sparse=0.0):
    preds = jnp.asarray(preds)                 # keep native dtype; cast in kernel
    labels = jnp.asarray(labels)
    n, c = preds.shape
    single = (c == 1)
    gamma = float(gamma)
    lambda_sparse = float(lambda_sparse)

    # Lane-dense tiling: rows of 128 examples; rows per tile TR (multiple of 16).
    rows = -(-n // _LANES)
    if rows <= _TR_MAX:
        tr = -(-rows // _SUB) * _SUB           # single-shot: whole array, grid=(1,)
    else:
        tr = _TR_MAX
    rows_pad = -(-rows // tr) * tr
    n_pad = rows_pad * _LANES
    grid = (rows_pad // tr,)
    pad = n_pad - n

    def plane(x):
        return jnp.pad(x, (0, pad)).reshape(rows_pad, _LANES)

    l1_plane = plane(preds[:, -1])                                      # positive logits
    t_plane = plane(labels.astype(jnp.float32) + 1.0).astype(jnp.bfloat16)

    blk = lambda: pl.BlockSpec((tr, _LANES), lambda i: (i, 0))
    inputs, in_specs = [], []
    if not single:
        inputs.append(plane(preds[:, 0]))
        in_specs.append(blk())
    inputs.append(l1_plane)
    in_specs.append(blk())
    inputs.append(t_plane)
    in_specs.append(blk())

    scratch_shapes = [pltpu.VMEM((8, _LANES), jnp.float32)]             # acc_main
    if gamma == 0.0:
        scratch_shapes.append(pltpu.VMEM((8, _LANES), jnp.float32))     # acc_den
    if lambda_sparse > 0.0:
        scratch_shapes.append(pltpu.VMEM((8, _LANES), jnp.float32))     # acc_sp

    kernel = functools.partial(
        _wbce_kernel,
        w0=float(weights[0]), w1=float(weights[1]),
        gamma=gamma, lambda_sparse=lambda_sparse,
        n_total=float(n), single_logit=single)

    out = pl.pallas_call(
        kernel,
        out_shape=jax.ShapeDtypeStruct((1, 1), jnp.float32),
        grid_spec=pltpu.PrefetchScalarGridSpec(
            num_scalar_prefetch=0,
            grid=grid,
            in_specs=in_specs,
            out_specs=pl.BlockSpec((1, 1), lambda i: (0, 0)),
            scratch_shapes=scratch_shapes),
        compiler_params=pltpu.CompilerParams(
            dimension_semantics=("arbitrary",)),
    )(*inputs)
    return out[0, 0]


def _reference_loss(preds, labels, weights, gamma, lambda_sparse):
    """Pure-JAX reference mirroring the PyTorch forward."""
    preds = jnp.asarray(preds, jnp.float32)
    if preds.shape[1] == 1:
        preds = jnp.concatenate([-preds, preds], axis=1)
    labels = jnp.asarray(labels).astype(jnp.int32)
    w_vec = jnp.asarray(weights, jnp.float32)
    w = w_vec[labels]
    logp = jax.nn.log_softmax(preds, axis=1)
    logp_y = jnp.take_along_axis(logp, labels[:, None], axis=1)[:, 0]
    if gamma == 0.0:
        main = jnp.sum(-w * logp_y) / jnp.sum(w)
    else:
        pt = jnp.clip(jnp.exp(logp_y), 1e-6, 1.0 - 1e-6)
        main = jnp.mean(-w * (1.0 - pt) ** gamma * jnp.log(pt))
    if lambda_sparse > 0.0:
        main = main + lambda_sparse * jnp.mean(jnp.abs(preds[:, 1]))
    return main


if __name__ == "__main__":
    key = jax.random.PRNGKey(0)
    k_preds, k_labels = jax.random.split(key)

    N = 16
    preds = jax.random.normal(k_preds, (N, 2), dtype=jnp.float32)         # (batch, 2 classes)
    labels = jax.random.bernoulli(k_labels, 0.5, (N,)).astype(jnp.int32)  # binary targets
    weights = (1.0, 3.0)   # deterministic "module parameter" (self.weights)

    # Config A: gamma == 0 -> weighted CrossEntropyLoss path (+ sparsity term)
    loss_a = weighted_bce_loss(preds, labels, weights=weights,
                               gamma=0.0, lambda_sparse=0.1)
    jax.block_until_ready(loss_a)
    ref_a = _reference_loss(preds, labels, weights, 0.0, 0.1)

    # Config B: gamma > 0 -> focal-loss path, exercising the C==1 input branch
    preds1 = preds[:, 1:2]   # (N, 1); kernel handles [-p, p] implicitly
    loss_b = weighted_bce_loss(preds1, labels, weights=weights,
                               gamma=2.0, lambda_sparse=0.0)
    jax.block_until_ready(loss_b)
    ref_b = _reference_loss(preds1, labels, weights, 2.0, 0.0)

    assert np.allclose(np.asarray(loss_a), np.asarray(ref_a), rtol=1e-5, atol=1e-5), \
        (loss_a, ref_a)
    assert np.allclose(np.asarray(loss_b), np.asarray(ref_b), rtol=1e-5, atol=1e-5), \
        (loss_b, ref_b)

    print("KERNEL_OK")
</pallas_src>

<mosaic_0001>
module attributes {stable_mosaic.version = 11 : i64} {
  func.func @_wbce_kernel(%arg0: i32, %arg1: memref<16x128xf32, #tpu.memory_space<vmem>>, %arg2: memref<16x128xf32, #tpu.memory_space<vmem>>, %arg3: memref<16x128xbf16, #tpu.memory_space<vmem>>, %arg4: memref<1x1xf32, #tpu.memory_space<vmem>>, %arg5: memref<8x128xf32, #tpu.memory_space<vmem>>, %arg6: memref<8x128xf32, #tpu.memory_space<vmem>>, %arg7: memref<8x128xf32, #tpu.memory_space<vmem>>) attributes {dimension_semantics = [#tpu.dimension_semantics<arbitrary>], iteration_bounds = array<i64: 1>, scalar_prefetch = 0 : i64, scratch_operands = 3 : i64, tpu.core_type = #tpu.core_type<tc>, window_params = [{transform_indices = @transform_0, window_bounds = array<i64: 16, 128>}, {transform_indices = @transform_1, window_bounds = array<i64: 16, 128>}, {transform_indices = @transform_2, window_bounds = array<i64: 16, 128>}, {pipeline_mode = #tpu.pipeline_mode<synchronous>, transform_indices = @transform_3, window_bounds = array<i64: 1, 1>}]} {
    %c0_i32 = arith.constant 0 : i32
    %0 = arith.cmpi eq, %arg0, %c0_i32 : i32
    %1 = arith.extui %0 : i1 to i32
    %c0_i32_0 = arith.constant 0 : i32
    %2 = arith.cmpi ne, %1, %c0_i32_0 : i32
    scf.if %2 {
      %cst_34 = arith.constant 0.000000e+00 : f32
      %59 = vector.broadcast %cst_34 : f32 to vector<8x128xf32>
      %c0_35 = arith.constant 0 : index
      %c0_36 = arith.constant 0 : index
      %60 = vector.load %arg5[%c0_35, %c0_36] : memref<8x128xf32, #tpu.memory_space<vmem>>, vector<8x128xf32>
      tpu.vector_store %arg5[%c0_35, %c0_36], %59 {strides = array<i32>} : memref<8x128xf32, #tpu.memory_space<vmem>>, vector<8x128xf32>,
      %cst_37 = arith.constant 0.000000e+00 : f32
      %61 = vector.broadcast %cst_37 : f32 to vector<8x128xf32>
      %c0_38 = arith.constant 0 : index
      %c0_39 = arith.constant 0 : index
      %62 = vector.load %arg6[%c0_38, %c0_39] : memref<8x128xf32, #tpu.memory_space<vmem>>, vector<8x128xf32>
      tpu.vector_store %arg6[%c0_38, %c0_39], %61 {strides = array<i32>} : memref<8x128xf32, #tpu.memory_space<vmem>>, vector<8x128xf32>,
      %cst_40 = arith.constant 0.000000e+00 : f32
      %63 = vector.broadcast %cst_40 : f32 to vector<8x128xf32>
      %c0_41 = arith.constant 0 : index
      %c0_42 = arith.constant 0 : index
      %64 = vector.load %arg7[%c0_41, %c0_42] : memref<8x128xf32, #tpu.memory_space<vmem>>, vector<8x128xf32>
      tpu.vector_store %arg7[%c0_41, %c0_42], %63 {strides = array<i32>} : memref<8x128xf32, #tpu.memory_space<vmem>>, vector<8x128xf32>,
    } else {
    }
    %c0 = arith.constant 0 : index
    %c0_1 = arith.constant 0 : index
    %3 = vector.load %arg2[%c0, %c0_1] : memref<16x128xf32, #tpu.memory_space<vmem>>, vector<16x128xf32>
    %c0_2 = arith.constant 0 : index
    %c0_3 = arith.constant 0 : index
    %4 = vector.load %arg1[%c0_2, %c0_3] : memref<16x128xf32, #tpu.memory_space<vmem>>, vector<16x128xf32>
    %5 = arith.subf %3, %4 : vector<16x128xf32>
    %c0_4 = arith.constant 0 : index
    %c0_5 = arith.constant 0 : index
    %6 = vector.load %arg3[%c0_4, %c0_5] : memref<16x128xbf16, #tpu.memory_space<vmem>>, vector<16x128xbf16>
    %7 = arith.extf %6 : vector<16x128xbf16> to vector<16x128xf32>
    %cst = arith.constant 1.000000e+00 : f32
    %8 = vector.broadcast %cst : f32 to vector<16x128xf32>
    %9 = arith.subf %7, %8 : vector<16x128xf32>
    %cst_6 = arith.constant 0.000000e+00 : f32
    %10 = vector.broadcast %cst_6 : f32 to vector<16x128xf32>
    %11 = arith.maximumf %9, %10 : vector<16x128xf32>
    %cst_7 = arith.constant 1.000000e+00 : f32
    %12 = vector.broadcast %cst_7 : f32 to vector<16x128xf32>
    %13 = arith.minimumf %7, %12 : vector<16x128xf32>
    %cst_8 = arith.constant 2.000000e+00 : f32
    %14 = vector.broadcast %cst_8 : f32 to vector<16x128xf32>
    %15 = arith.mulf %14, %11 : vector<16x128xf32>
    %cst_9 = arith.constant 1.000000e+00 : f32
    %16 = vector.broadcast %cst_9 : f32 to vector<16x128xf32>
    %17 = arith.addf %16, %15 : vector<16x128xf32>
    %18 = arith.mulf %13, %17 : vector<16x128xf32>
    %cst_10 = arith.constant 2.000000e+00 : f32
    %19 = vector.broadcast %cst_10 : f32 to vector<16x128xf32>
    %20 = arith.mulf %19, %11 : vector<16x128xf32>
    %cst_11 = arith.constant 1.000000e+00 : f32
    %21 = vector.broadcast %cst_11 : f32 to vector<16x128xf32>
    %22 = arith.subf %21, %20 : vector<16x128xf32>
    %23 = arith.mulf %22, %5 : vector<16x128xf32>
    %cst_12 = arith.constant 0.000000e+00 : f32
    %24 = vector.broadcast %cst_12 : f32 to vector<16x128xf32>
    %25 = arith.maximumf %23, %24 : vector<16x128xf32>
    %26 = math.absf %23 : vector<16x128xf32>
    %cst_13 = arith.constant 0.000000e+00 : f32
    %27 = vector.broadcast %cst_13 : f32 to vector<16x128xf32>
    %28 = arith.subf %27, %26 : vector<16x128xf32>
    %29 = math.exp %28 : vector<16x128xf32>
    %cst_14 = arith.constant 1.000000e+00 : f32
    %30 = vector.broadcast %cst_14 : f32 to vector<16x128xf32>
    %31 = arith.addf %30, %29 : vector<16x128xf32>
    %32 = math.log %31 : vector<16x128xf32>
    %33 = arith.addf %25, %32 : vector<16x128xf32>
    %cst_15 = arith.constant 0.000000e+00 : f32
    %34 = vector.broadcast %cst_15 : f32 to vector<16x128xf32>
    %35 = arith.subf %34, %33 : vector<16x128xf32>
    %cst_16 = arith.constant 0.000000e+00 : f32
    %36 = vector.broadcast %cst_16 : f32 to vector<16x128xf32>
    %37 = arith.subf %36, %18 : vector<16x128xf32>
    %38 = arith.mulf %37, %35 : vector<16x128xf32>
    %c0_17 = arith.constant 0 : index
    %c0_18 = arith.constant 0 : index
    %39 = vector.load %arg5[%c0_17, %c0_18] : memref<8x128xf32, #tpu.memory_space<vmem>>, vector<8x128xf32>
    %40 = vector.shape_cast %38 : vector<16x128xf32> to vector<2x8x128xf32>
    %cst_19 = arith.constant dense<0.000000e+00> : vector<8x128xf32>
    %41 = vector.multi_reduction <add>, %40, %cst_19 [0] : vector<2x8x128xf32> to vector<8x128xf32>
    %42 = arith.addf %39, %41 : vector<8x128xf32>
    %c0_20 = arith.constant 0 : index
    %c0_21 = arith.constant 0 : index
    %43 = vector.load %arg5[%c0_20, %c0_21] : memref<8x128xf32, #tpu.memory_space<vmem>>, vector<8x128xf32>
    tpu.vector_store %arg5[%c0_20, %c0_21], %42 {strides = array<i32>} : memref<8x128xf32, #tpu.memory_space<vmem>>, vector<8x128xf32>,
    %c0_22 = arith.constant 0 : index
    %c0_23 = arith.constant 0 : index
    %44 = vector.load %arg6[%c0_22, %c0_23] : memref<8x128xf32, #tpu.memory_space<vmem>>, vector<8x128xf32>
    %45 = vector.shape_cast %18 : vector<16x128xf32> to vector<2x8x128xf32>
    %cst_24 = arith.constant dense<0.000000e+00> : vector<8x128xf32>
    %46 = vector.multi_reduction <add>, %45, %cst_24 [0] : vector<2x8x128xf32> to vector<8x128xf32>
    %47 = arith.addf %44, %46 : vector<8x128xf32>
    %c0_25 = arith.constant 0 : index
    %c0_26 = arith.constant 0 : index
    %48 = vector.load %arg6[%c0_25, %c0_26] : memref<8x128xf32, #tpu.memory_space<vmem>>, vector<8x128xf32>
    tpu.vector_store %arg6[%c0_25, %c0_26], %47 {strides = array<i32>} : memref<8x128xf32, #tpu.memory_space<vmem>>, vector<8x128xf32>,
    %49 = math.absf %3 : vector<16x128xf32>
    %50 = arith.mulf %49, %13 : vector<16x128xf32>
    %c0_27 = arith.constant 0 : index
    %c0_28 = arith.constant 0 : index
    %51 = vector.load %arg7[%c0_27, %c0_28] : memref<8x128xf32, #tpu.memory_space<vmem>>, vector<8x128xf32>
    %52 = vector.shape_cast %50 : vector<16x128xf32> to vector<2x8x128xf32>
    %cst_29 = arith.constant dense<0.000000e+00> : vector<8x128xf32>
    %53 = vector.multi_reduction <add>, %52, %cst_29 [0] : vector<2x8x128xf32> to vector<8x128xf32>
    %54 = arith.addf %51, %53 : vector<8x128xf32>
    %c0_30 = arith.constant 0 : index
    %c0_31 = arith.constant 0 : index
    %55 = vector.load %arg7[%c0_30, %c0_31] : memref<8x128xf32, #tpu.memory_space<vmem>>, vector<8x128xf32>
    tpu.vector_store %arg7[%c0_30, %c0_31], %54 {strides = array<i32>} : memref<8x128xf32, #tpu.memory_space<vmem>>, vector<8x128xf32>,
    %c0_i32_32 = arith.constant 0 : i32
    %56 = arith.cmpi eq, %arg0, %c0_i32_32 : i32
    %57 = arith.extui %56 : i1 to i32
    %c0_i32_33 = arith.constant 0 : i32
    %58 = arith.cmpi ne, %57, %c0_i32_33 : i32
    scf.if %58 {
      %c0_34 = arith.constant 0 : index
      %c0_35 = arith.constant 0 : index
      %59 = vector.load %arg5[%c0_34, %c0_35] : memref<8x128xf32, #tpu.memory_space<vmem>>, vector<8x128xf32>
      %60 = vector.shape_cast %59 : vector<8x128xf32> to vector<1x8x128xf32>
      %cst_36 = arith.constant dense<0.000000e+00> : vector<1xf32>
      %61 = vector.multi_reduction <add>, %60, %cst_36 [1, 2] : vector<1x8x128xf32> to vector<1xf32>
      %62 = vector.shape_cast %61 : vector<1xf32> to vector<1x1x1xf32>
      %63 = vector.extract %62[0, 0, 0] : f32 from vector<1x1x1xf32>
      %64 = vector.broadcast %63 : f32 to vector<1x1xf32>
      %c0_37 = arith.constant 0 : index
      %c0_38 = arith.constant 0 : index
      %65 = vector.load %arg6[%c0_37, %c0_38] : memref<8x128xf32, #tpu.memory_space<vmem>>, vector<8x128xf32>
      %66 = vector.shape_cast %65 : vector<8x128xf32> to vector<1x8x128xf32>
      %cst_39 = arith.constant dense<0.000000e+00> : vector<1xf32>
      %67 = vector.multi_reduction <add>, %66, %cst_39 [1, 2] : vector<1x8x128xf32> to vector<1xf32>
      %68 = vector.shape_cast %67 : vector<1xf32> to vector<1x1x1xf32>
      %69 = vector.extract %68[0, 0, 0] : f32 from vector<1x1x1xf32>
      %70 = vector.broadcast %69 : f32 to vector<1x1xf32>
      %71 = arith.divf %64, %70 : vector<1x1xf32>
      %c0_40 = arith.constant 0 : index
      %c0_41 = arith.constant 0 : index
      %72 = vector.load %arg7[%c0_40, %c0_41] : memref<8x128xf32, #tpu.memory_space<vmem>>, vector<8x128xf32>
      %73 = vector.shape_cast %72 : vector<8x128xf32> to vector<1x8x128xf32>
      %cst_42 = arith.constant dense<0.000000e+00> : vector<1xf32>
      %74 = vector.multi_reduction <add>, %73, %cst_42 [1, 2] : vector<1x8x128xf32> to vector<1xf32>
      %75 = vector.shape_cast %74 : vector<1xf32> to vector<1x1x1xf32>
      %76 = vector.extract %75[0, 0, 0] : f32 from vector<1x1x1xf32>
      %77 = vector.broadcast %76 : f32 to vector<1x1xf32>
      %cst_43 = arith.constant 1.000000e-01 : f32
      %78 = vector.broadcast %cst_43 : f32 to vector<1x1xf32>
      %79 = arith.mulf %78, %77 : vector<1x1xf32>
      %cst_44 = arith.constant 1.600000e+01 : f32
      %80 = vector.broadcast %cst_44 : f32 to vector<1x1xf32>
      %81 = arith.divf %79, %80 : vector<1x1xf32>
      %82 = arith.addf %71, %81 : vector<1x1xf32>
      %c0_45 = arith.constant 0 : index
      %c0_46 = arith.constant 0 : index
      %83 = vector.load %arg4[%c0_45, %c0_46] : memref<1x1xf32, #tpu.memory_space<vmem>>, vector<1x1xf32>
      tpu.vector_store %arg4[%c0_45, %c0_46], %82 {strides = array<i32>} : memref<1x1xf32, #tpu.memory_space<vmem>>, vector<1x1xf32>,
    } else {
    }
    return
  }
  func.func @transform_0(%arg0: i32) -> (i32, i32) {
    %c0_i32 = arith.constant 0 : i32
    %c0_i32_0 = arith.constant 0 : i32
    return %arg0, %c0_i32 : i32, i32
  }
  func.func @transform_1(%arg0: i32) -> (i32, i32) {
    %c0_i32 = arith.constant 0 : i32
    %c0_i32_0 = arith.constant 0 : i32
    return %arg0, %c0_i32 : i32, i32
  }
  func.func @transform_2(%arg0: i32) -> (i32, i32) {
    %c0_i32 = arith.constant 0 : i32
    %c0_i32_0 = arith.constant 0 : i32
    return %arg0, %c0_i32 : i32, i32
  }
  func.func @transform_3(%arg0: i32) -> (i32, i32) {
    %c0_i32 = arith.constant 0 : i32
    %c0_i32_0 = arith.constant 0 : i32
    %c0_i32_1 = arith.constant 0 : i32
    return %c0_i32, %c0_i32_0 : i32, i32
  }
}

</mosaic_0001>

<llo_original>
// kernel: tpu_custom_call.1
$region0: #{tpu_custom_call.1}
  #allocation0 [shape = 'u32[]', space=smem, size = 0x4, offset = 0x4, fixed_abs, tag = 'smem constant byte address 0x4 - core index']
  #allocation1 [shape = 'u32[144,128]{1,0:T(1,128)}', space=vmem, size = 0x12000, scoped, tag = 'internal scratch']
  #allocation2 [shape = 'f32[8,128]{1,0:T(8,128)}', space=vmem, size = 0x1000, scoped, tag = 'scratch operand']
  #allocation3 [shape = 'f32[8,128]{1,0:T(8,128)}', space=vmem, size = 0x1000, scoped, tag = 'scratch operand']
  #allocation4 [shape = 'f32[8,128]{1,0:T(8,128)}', space=vmem, size = 0x1000, scoped, tag = 'scratch operand']
  %s0 = inlined_call_operand.hbm [shape: f32[16,128], index: 0, kind: input, shape index: {}]
  %s1 = inlined_call_operand.hbm [shape: f32[16,128], index: 1, kind: input, shape index: {}]
  %s2 = inlined_call_operand.hbm [shape: bf16[16,128], index: 2, kind: input, shape index: {}]
  %s3 = inlined_call_operand.hbm [shape: f32[1,1], index: 3, kind: output, shape index: {}]
  %s4 = sld [smem:[#allocation0]]
  $region42: #{tpu_custom_call.1} parent=0
    _
  %s6 = ssub.s32 1, %s4
  %s7 = scalar_select 0, %s6, %s4
  $region1: #{tpu_custom_call.1} parent=0
    #allocation5 [shape = 'u8[8192]{0}', space=vmem, size = 0x2000, scoped, tag = 'input window, operand 0, single buffered']
    #allocation6 [shape = 's32[1]{0}', space=sflag, size = 0x4, scoped, tag = 'scoped memory for tpu_custom_call.1']
    #allocation7 [shape = 's32[1]{0}', space=sflag, size = 0x4, scoped, tag = 'scoped memory for tpu_custom_call.1']
    #allocation8 [shape = 'u8[8192]{0}', space=vmem, size = 0x2000, scoped, tag = 'input window, operand 1, single buffered']
    #allocation9 [shape = 's32[1]{0}', space=sflag, size = 0x4, scoped, tag = 'scoped memory for tpu_custom_call.1']
    #allocation10 [shape = 'u8[4096]{0}', space=vmem, size = 0x1000, scoped, tag = 'input window, operand 2, single buffered']
    #allocation11 [shape = 'u8[512]{0}', space=vmem, size = 0x400, scoped, tag = 'output window, operand 0, single buffered']
    %8 = vsyncpa [#allocation6], 0
    %9 = vsyncpa [#allocation9], 0
    %10 = vsyncpa [#allocation7], 0
    // Predicated region
    $region2: #{tpu_custom_call.1} parent=1 // pred_check
      _
    $region3: #{tpu_custom_call.1} parent=1 // pred_check_branch
      %12 = sbr.rel (0) target = $region5
    $region4: #{tpu_custom_call.1} parent=1 // pred_region
      %s14 = ssub.s32 256, 256
      %15 = vsyncadd [#allocation6], %s14
      %s16 = sshll.u32 [#allocation5], 4
      %s17 = int_to_ptr.vmem [resolvable:$true] %s16
      %22 = dma.hbm_to_vmem [thread:$0]  %s0, 256, %s17, [#allocation6], 128, 128, 8
    $region5: #{tpu_custom_call.1} parent=1 // pred_fallthru
      _
    // Predicated region
    $region6: #{tpu_custom_call.1} parent=1 // pred_check
      _
    $region7: #{tpu_custom_call.1} parent=1 // pred_check_branch
      %24 = sbr.rel (0) target = $region9
    $region8: #{tpu_custom_call.1} parent=1 // pred_region
      %s26 = ssub.s32 256, 256
      %27 = vsyncadd [#allocation9], %s26
      %s28 = sshll.u32 [#allocation8], 4
      %s29 = int_to_ptr.vmem [resolvable:$true] %s28
      %34 = dma.hbm_to_vmem [thread:$0]  %s1, 256, %s29, [#allocation9], 128, 128, 8
    $region9: #{tpu_custom_call.1} parent=1 // pred_fallthru
      _
    // Predicated region
    $region10: #{tpu_custom_call.1} parent=1 // pred_check
      _
    $region11: #{tpu_custom_call.1} parent=1 // pred_check_branch
      %36 = sbr.rel (0) target = $region13
    $region12: #{tpu_custom_call.1} parent=1 // pred_region
      %s38 = ssub.s32 128, 128
      %39 = vsyncadd [#allocation9], %s38
      %s40 = sshll.u32 [#allocation10], 4
      %s41 = int_to_ptr.vmem [resolvable:$true] %s40
      %46 = dma.hbm_to_vmem [thread:$0]  %s2, 128, %s41, [#allocation9], 64, 64, 4
    $region13: #{tpu_custom_call.1} parent=1 // pred_fallthru
      _
    // Predicated region
    $region14: #{tpu_custom_call.1} parent=1 // pred_check
      _
    $region15: #{tpu_custom_call.1} parent=1 // pred_check_branch
      %48 = sbr.rel (0) target = $region17
    $region16: #{tpu_custom_call.1} parent=1 // pred_region
      %49 = dma.done [#allocation6], 256
    $region17: #{tpu_custom_call.1} parent=1 // pred_fallthru
      _
    // Predicated region
    $region18: #{tpu_custom_call.1} parent=1 // pred_check
      _
    $region19: #{tpu_custom_call.1} parent=1 // pred_check_branch
      %51 = sbr.rel (0) target = $region21
    $region20: #{tpu_custom_call.1} parent=1 // pred_region
      %52 = dma.done [#allocation9], 256
    $region21: #{tpu_custom_call.1} parent=1 // pred_fallthru
      _
    // Predicated region
    $region22: #{tpu_custom_call.1} parent=1 // pred_check
      _
    $region23: #{tpu_custom_call.1} parent=1 // pred_check_branch
      %54 = sbr.rel (0) target = $region25
    $region24: #{tpu_custom_call.1} parent=1 // pred_region
      %55 = dma.done [#allocation9], 128
    $region25: #{tpu_custom_call.1} parent=1 // pred_fallthru
      _
    %p56 = scmp.eq.s32.totalorder 0, 0
    // Predicated region
    $region26: #{tpu_custom_call.1} parent=1 // pred_check
      %p57 = pneg %p56
    $region27: #{tpu_custom_call.1} parent=1 // pred_check_branch
      %59 = sbr.rel (%p57) target = $region29
    $region28: #{tpu_custom_call.1} parent=1 // pred_region
      %60 = vst [vmem:[#allocation2] sm:$0xff] 0.0
      %61 = vst [vmem:[#allocation3] sm:$0xff] 0.0
      %62 = vst [vmem:[#allocation4] sm:$0xff] 0.0
    $region29: #{tpu_custom_call.1} parent=1 // pred_fallthru
      _
    %v63 = vld [vmem:[#allocation8] sm:$0xff]
    %v64 = vld [vmem:[#allocation8 + $0x8] sm:$0xff]
    %v65 = vld [vmem:[#allocation5] sm:$0xff]
    %v66 = vld [vmem:[#allocation5 + $0x8] sm:$0xff]
    %v67 = vsub.f32 %v63, %v65
    %v68 = vsub.f32 %v64, %v66
    %v69 = vld [vmem:[#allocation10] sm:$0xf]
    %v70 = vld [vmem:[#allocation10 + $0x4] sm:$0xf]
    %v71 = vunpack.c.l.bf16 %v69
    %v72 = vunpack.c.l.bf16 %v70
    %v73 = vsub.f32 %v71, 1.0
    %v74 = vsub.f32 %v72, 1.0
    %v75 = vmax.f32 %v73, 0.0
    %v76 = vmax.f32 %v74, 0.0
    %v77 = vmin.f32 %v71, 1.0
    %v78 = vmin.f32 %v72, 1.0
    %v79 = vmul.f32 %v75, 2.0
    %v80 = vmul.f32 %v76, 2.0
    %v81 = vadd.f32 %v79, 1.0
    %v82 = vadd.f32 %v80, 1.0
    %v83 = vmul.f32 %v77, %v81
    %v84 = vmul.f32 %v78, %v82
    %v85 = vsub.f32 1.0, %v79
    %v86 = vsub.f32 1.0, %v80
    %v87 = vmul.f32 %v85, %v67
    %v88 = vmul.f32 %v86, %v68
    %v89 = vmax.f32 %v87, 0.0
    %v90 = vmax.f32 %v88, 0.0
    %v91 = vand.u32 2147483647, %v87
    %v92 = vand.u32 2147483647, %v88
    %v93 = vsub.f32 0.0, %v91
    %v94 = vsub.f32 0.0, %v92
    %v95 = vmul.f32 %v93, 1.442695
    %v96 = vpow.pop %v95
    %v97 = vmul.f32 %v94, 1.442695
    %v98 = vpow.pop %v97
    %v99 = vadd.f32 %v96, 1.0
    %v100 = vadd.f32 %v98, 1.0
    %v101 = vlog2.pop %v99
    %v102 = vmul.f32 %v101, 0.6931472
    %v103 = vlog2.pop %v100
    %v104 = vmul.f32 %v103, 0.6931472
    %v105 = vadd.f32 %v89, %v102
    %v106 = vadd.f32 %v90, %v104
    %v107 = vsub.f32 0.0, %v105
    %v108 = vsub.f32 0.0, %v106
    %v109 = vsub.f32 0.0, %v83
    %v110 = vsub.f32 0.0, %v84
    %v111 = vmul.f32 %v109, %v107
    %v112 = vmul.f32 %v110, %v108
    %v113 = vld [vmem:[#allocation2] sm:$0xff]
    %v114 = vadd.f32 %v111, %v112
    %v115 = vadd.f32 %v113, %v114
    %116 = vst [vmem:[#allocation2] sm:$0xff] %v115
    %v117 = vld [vmem:[#allocation3] sm:$0xff]
    %v118 = vadd.f32 %v83, %v84
    %v119 = vadd.f32 %v117, %v118
    %120 = vst [vmem:[#allocation3] sm:$0xff] %v119
    %v121 = vand.u32 2147483647, %v63
    %v122 = vand.u32 2147483647, %v64
    %v123 = vmul.f32 %v121, %v77
    %v124 = vmul.f32 %v122, %v78
    %v125 = vld [vmem:[#allocation4] sm:$0xff]
    %v126 = vadd.f32 %v123, %v124
    %v127 = vadd.f32 %v125, %v126
    %128 = vst [vmem:[#allocation4] sm:$0xff] %v127
    // Predicated region
    $region30: #{tpu_custom_call.1} parent=1 // pred_check
      %p129 = pneg %p56
    $region31: #{tpu_custom_call.1} parent=1 // pred_check_branch
      %131 = sbr.rel (%p129) target = $region33
    $region32: #{tpu_custom_call.1} parent=1 // pred_region
      %v132 = vld [vmem:[#allocation2] sm:$0xff]
      %133 = vadd.xlane.f32.xlu0 %v132
      %v134 = vpop.xlane.xlu0 %133
      %v135 = vrot.slane %v134, 4
      %v136 = vadd.f32 %v134, %v135
      %v137 = vrot.slane %v136, 2
      %v138 = vadd.f32 %v136, %v137
      %v139 = vrot.slane %v138, 1
      %v140 = vadd.f32 %v138, %v139
      %s141 = vtos %v140
      %v142 = vstv %s141
      %v143 = vld [vmem:[#allocation3] sm:$0xff]
      %144 = vadd.xlane.f32.xlu0 %v143
      %v145 = vpop.xlane.xlu0 %144
      %v146 = vrot.slane %v145, 4
      %v147 = vadd.f32 %v145, %v146
      %v148 = vrot.slane %v147, 2
      %v149 = vadd.f32 %v147, %v148
      %v150 = vrot.slane %v149, 1
      %v151 = vadd.f32 %v149, %v150
      %s152 = vtos %v151
      %v153 = vstv %s152
      %v154 = vrcp.pop %v153
      %v155 = vmul.f32 %v142, %v154
      %v156 = vld [vmem:[#allocation4] sm:$0xff]
      %157 = vadd.xlane.f32.xlu0 %v156
      %v158 = vpop.xlane.xlu0 %157
      %v159 = vrot.slane %v158, 4
      %v160 = vadd.f32 %v158, %v159
      %v161 = vrot.slane %v160, 2
      %v162 = vadd.f32 %v160, %v161
      %v163 = vrot.slane %v162, 1
      %v164 = vadd.f32 %v162, %v163
      %s165 = vtos %v164
      %v166 = vstv %s165
      %v167 = vmul.f32 %v166, 0.1
      %v168 = vrcp.pop 16.0
      %v169 = vmul.f32 %v167, %v168
      %v170 = vadd.f32 %v155, %v169
      %vm171 = vcmask 0
      %172 = vst.msk [vmem:[#allocation11] sm:$0x1] %vm171, %v170
    $region33: #{tpu_custom_call.1} parent=1 // pred_fallthru
      _
    // Predicated region
    $region34: #{tpu_custom_call.1} parent=1 // pred_check
      _
    $region35: #{tpu_custom_call.1} parent=1 // pred_check_branch
      %174 = sbr.rel (0) target = $region37
    $region36: #{tpu_custom_call.1} parent=1 // pred_region
      %s176 = ssub.s32 16, 16
      %177 = vsyncadd [#allocation7], %s176
      %s179 = sshll.u32 [#allocation11], 4
      %s180 = int_to_ptr.vmem [resolvable:$true] %s179
      %182 = dma.vmem_to_hbm [thread:$0]  %s180, 16, %s3, [#allocation7]
    $region37: #{tpu_custom_call.1} parent=1 // pred_fallthru
      _
    // Predicated region
    $region38: #{tpu_custom_call.1} parent=1 // pred_check
      _
    $region39: #{tpu_custom_call.1} parent=1 // pred_check_branch
      %184 = sbr.rel (0) target = $region41
    $region40: #{tpu_custom_call.1} parent=1 // pred_region
      %185 = dma.done [#allocation7], 16
    $region41: #{tpu_custom_call.1} parent=1 // pred_fallthru
      _
    %186 = vsyncpa [#allocation6], 1
    %187 = vsyncpa [#allocation9], 1
    %188 = vsyncpa [#allocation7], 1

</llo_original>
